<compile_context>
chip_gen: v7x
topology: tpu7x:2x2x1
jax: 0.10.0
libtpu: 0.0.40
codegen_flags: <defaults>
</compile_context>

<pallas_src>
import functools

import jax
import jax.numpy as jnp
from jax import lax
from jax.experimental import pallas as pl
from jax.experimental.pallas import tpu as pltpu

_IN_EPS = 1e-5  # torch.nn.InstanceNorm2d default


# ---------------------------------------------------------------------------
# Generation-aware block sizing.
# ---------------------------------------------------------------------------
def _tpu_config():
    """Returns (target_block_bytes, vmem_limit_bytes, num_tensorcores)."""
    vmem_cap = None
    try:
        vmem_cap = int(pltpu.get_tpu_info().vmem_capacity_bytes)
    except Exception:
        vmem_cap = None
    kind = ""
    try:
        kind = jax.devices()[0].device_kind.lower()
    except Exception:
        pass
    is_v7 = ("v7" in kind) or (vmem_cap is not None and vmem_cap <= 64 * 1024 * 1024)
    if is_v7:
        # 64 MiB physical VMEM / 2 TensorCores: cap blocks and scoped VMEM.
        return 6 * 1024 * 1024, 48 * 1024 * 1024, 2
    # v5e / v6e: 128 MiB VMEM, single TensorCore: bigger blocks, no forced split.
    return 12 * 1024 * 1024, 64 * 1024 * 1024, 1


def _pick_batch_block(batch, per_batch_bytes, target_bytes, num_tensorcores,
                      min_parallel_bytes=256 * 1024):
    """Largest divisor of `batch` whose block stays under target_bytes.

    On multi-TensorCore chips (v7x) a 1-step grid leaves a core idle, so if
    the whole batch fits in one block we split into an even number of steps,
    provided each step still moves enough bytes to amortize the ~0.35us
    per-step overhead.  Single-TC chips (v5e/v6e) keep the single big block.
    """
    divisors = [d for d in range(batch, 0, -1) if batch % d == 0]
    bb = next((d for d in divisors if d * per_batch_bytes <= target_bytes), 1)
    if num_tensorcores > 1 and bb == batch and batch > 1:
        for d in divisors:
            if d >= batch:
                continue
            if (batch // d) % 2 == 0 and d * per_batch_bytes >= min_parallel_bytes:
                bb = d
                break
    return bb


def _reflect_pad_weights(n):
    """Per-index multiplicity of a size-n axis under ReflectionPad(1)."""
    w = jnp.ones((n,), jnp.float32)
    w = w.at[1 % n].add(1.0)        # reflection of index -1
    w = w.at[(n - 2) % n].add(1.0)  # reflection of index n
    return w


# ---------------------------------------------------------------------------
# Kernel 1: fused InstanceNorm + ReLU + CA1 + (reflect-pad folded) CA2.
# Operates on a lane-dense (Bb, C, HW) block; HW is the unpadded H*W.
# Output = relu(instance_norm(x)) * gate1 * gate2 on the unpadded map.
# ---------------------------------------------------------------------------
def _fused_in_relu_double_ca_kernel(x_ref, w1_ref, w2_ref, wmap_ref, o_ref, *,
                                    hw_pad):
    # x_ref:   (Bb, C, HW)  conv1 output (pre-norm)
    # w1_ref:  (C, Ch)      torch Linear(C, Ch).weight, pre-transposed
    # w2_ref:  (Ch, C)      torch Linear(Ch, C).weight, pre-transposed
    # wmap_ref:(1, HW)      reflect-pad multiplicity map (values 1/2/4)
    x = x_ref[...].astype(jnp.float32)                       # needed for IN math

    # Instance norm (affine=False, biased variance) + ReLU.
    mu = jnp.mean(x, axis=-1, keepdims=True)                  # (Bb, C, 1)
    xc = x - mu
    var = jnp.mean(xc * xc, axis=-1, keepdims=True)
    y = jnp.maximum(xc * lax.rsqrt(var + _IN_EPS), 0.0)       # (Bb, C, HW) f32

    def mlp_sum(a, b):
        # mlp(a)+mlp(b) without a sublane concat: (relu(aW1)+relu(bW1))W2.
        ha = jnp.maximum(jnp.dot(a, w1_ref[...],
                                 preferred_element_type=jnp.float32), 0.0)
        hb = jnp.maximum(jnp.dot(b, w1_ref[...],
                                 preferred_element_type=jnp.float32), 0.0)
        return jnp.dot(ha + hb, w2_ref[...], preferred_element_type=jnp.float32)

    # --- Channel attention #1 (on the H x W map) ---------------------------
    avg1 = jnp.mean(y, axis=-1)                                # (Bb, C)
    max1 = jnp.max(y, axis=-1)                                 # (Bb, C)
    g1 = jax.nn.sigmoid(mlp_sum(avg1, max1))                   # (Bb, C)

    # --- Channel attention #2 (on the reflect-padded map, folded) ----------
    # pad only copies values, and g1 > 0, so pooled(pad(g1*y)) is analytic:
    wsum = jnp.sum(y * wmap_ref[...], axis=-1)                 # (Bb, C)
    avg2 = g1 * (wsum * (1.0 / hw_pad))
    max2 = g1 * max1
    g2 = jax.nn.sigmoid(mlp_sum(avg2, max2))

    gate = (g1 * g2)[:, :, None]
    o_ref[...] = (y * gate).astype(o_ref.dtype)


def fused_in_relu_double_ca(x, w1, w2):
    """relu(instance_norm(x)) * g1 * g2 on the unpadded H x W map.

    Reflect-padding the result reproduces CA2(pad(CA1(relu(IN(x))))) exactly.
    x: (B, C, H, W); w1: (Ch, C) and w2: (C, Ch) are torch Linear weights.
    """
    B, C, H, W = x.shape
    HW = H * W
    Ch = w1.shape[0]
    hw_pad = float((H + 2) * (W + 2))

    x2 = x.reshape(B, C, HW)                  # lane-dense layout, outside kernel
    w1_t = jnp.transpose(w1)                  # (C, Ch)
    w2_t = jnp.transpose(w2)                  # (Ch, C)
    wmap = (_reflect_pad_weights(H)[:, None] *
            _reflect_pad_weights(W)[None, :]).reshape(1, HW)

    target_bytes, vmem_limit, num_tc = _tpu_config()
    # The kernel keeps an f32 working copy of the block -> budget on f32 bytes.
    per_batch_bytes = C * HW * max(4, jnp.dtype(x.dtype).itemsize)
    Bb = _pick_batch_block(B, per_batch_bytes, target_bytes, num_tc)
    grid = (B // Bb,)

    kernel = functools.partial(_fused_in_relu_double_ca_kernel, hw_pad=hw_pad)
    out2 = pl.pallas_call(
        kernel,
        out_shape=jax.ShapeDtypeStruct((B, C, HW), x.dtype),
        grid=grid,
        in_specs=[
            pl.BlockSpec((Bb, C, HW), lambda b: (b, 0, 0)),
            pl.BlockSpec((C, Ch), lambda b: (0, 0)),
            pl.BlockSpec((Ch, C), lambda b: (0, 0)),
            pl.BlockSpec((1, HW), lambda b: (0, 0)),
        ],
        out_specs=pl.BlockSpec((Bb, C, HW), lambda b: (b, 0, 0)),
        input_output_aliases={0: 0},
        compiler_params=pltpu.CompilerParams(
            dimension_semantics=("parallel",),
            vmem_limit_bytes=vmem_limit,
        ),
    )(x2, w1_t, w2_t, wmap)
    return out2.reshape(B, C, H, W)


# ---------------------------------------------------------------------------
# Kernel 2: standalone CBAM channel attention (kept for completeness / reuse).
# ---------------------------------------------------------------------------
def _channel_attention_kernel(x_ref, w1_ref, w2_ref, o_ref):
    # No eager full-block f32 copy: f32 accumulation only on the reductions,
    # gate apply in the I/O dtype.
    avg = jnp.mean(x_ref[...], axis=-1, dtype=jnp.float32)    # (Bb, C)
    mx = jnp.max(x_ref[...], axis=-1).astype(jnp.float32)     # (Bb, C)
    ha = jnp.maximum(jnp.dot(avg, w1_ref[...],
                             preferred_element_type=jnp.float32), 0.0)
    hb = jnp.maximum(jnp.dot(mx, w1_ref[...],
                             preferred_element_type=jnp.float32), 0.0)
    out = jnp.dot(ha + hb, w2_ref[...], preferred_element_type=jnp.float32)
    gate = jax.nn.sigmoid(out).astype(o_ref.dtype)             # (Bb, C)
    o_ref[...] = x_ref[...] * gate[:, :, None]


def channel_attention_forward(x, w1, w2):
    """CBAM channel attention. x: (B, C, H, W); w1: (Ch, C); w2: (C, Ch)."""
    B, C, H, W = x.shape
    HW = H * W
    Ch = w1.shape[0]

    x2 = x.reshape(B, C, HW)
    w1_t = jnp.transpose(w1)
    w2_t = jnp.transpose(w2)

    target_bytes, vmem_limit, num_tc = _tpu_config()
    per_batch_bytes = C * HW * jnp.dtype(x.dtype).itemsize
    Bb = _pick_batch_block(B, per_batch_bytes, target_bytes, num_tc)
    grid = (B // Bb,)

    out2 = pl.pallas_call(
        _channel_attention_kernel,
        out_shape=jax.ShapeDtypeStruct((B, C, HW), x.dtype),
        grid=grid,
        in_specs=[
            pl.BlockSpec((Bb, C, HW), lambda b: (b, 0, 0)),
            pl.BlockSpec((C, Ch), lambda b: (0, 0)),
            pl.BlockSpec((Ch, C), lambda b: (0, 0)),
        ],
        out_specs=pl.BlockSpec((Bb, C, HW), lambda b: (b, 0, 0)),
        input_output_aliases={0: 0},
        compiler_params=pltpu.CompilerParams(
            dimension_semantics=("parallel",),
            vmem_limit_bytes=vmem_limit,
        ),
    )(x2, w1_t, w2_t)
    return out2.reshape(B, C, H, W)


# ---------------------------------------------------------------------------
# Pure-JAX references / dense ops left to XLA.
# ---------------------------------------------------------------------------
def channel_attention_ref(x, w1, w2):
    avg = jnp.mean(x, axis=(2, 3))
    mx = jnp.max(x, axis=(2, 3))

    def mlp(v):
        return jnp.maximum(v @ w1.T, 0.0) @ w2.T

    gate = jax.nn.sigmoid(mlp(avg) + mlp(mx))
    return x * gate[:, :, None, None]


def _reflect_pad(x, p=1):
    return jnp.pad(x, ((0, 0), (0, 0), (p, p), (p, p)), mode="reflect")


def _conv3x3(x, w, b=None):
    y = lax.conv_general_dilated(
        x, w, window_strides=(1, 1), padding="VALID",
        dimension_numbers=("NCHW", "OIHW", "NCHW"))
    if b is not None:
        y = y + b[None, :, None, None]
    return y


def _instance_norm(x, eps=_IN_EPS):
    mean = jnp.mean(x, axis=(2, 3), keepdims=True)
    var = jnp.var(x, axis=(2, 3), keepdims=True)
    return (x - mean) * lax.rsqrt(var + eps)


def _cbam_segment_pallas(h, w1, w2):
    """InstanceNorm -> ReLU -> CA -> ReflectPad -> CA, one Pallas kernel + pad."""
    return _reflect_pad(fused_in_relu_double_ca(h, w1, w2))


def _cbam_segment_ref(h, w1, w2):
    h = _instance_norm(h)
    h = jnp.maximum(h, 0.0)
    h = channel_attention_ref(h, w1, w2)
    h = _reflect_pad(h)
    return channel_attention_ref(h, w1, w2)


def _fused_block_fits(x):
    B, C, H, W = x.shape
    target_bytes, _, _ = _tpu_config()
    return C * H * W * max(4, jnp.dtype(x.dtype).itemsize) <= target_bytes


# ---------------------------------------------------------------------------
# Full ResnetBlock_with_cbam_3 forward (padding_type='reflect',
# norm_layer=InstanceNorm2d(affine=False), use_dropout=False, use_bias=True).
# ---------------------------------------------------------------------------
def resnet_block_cbam3_forward(x, params, use_pallas=True):
    w1, w2 = params["ca_w1"], params["ca_w2"]
    h = _reflect_pad(x)
    h = _conv3x3(h, params["conv1_w"], params["conv1_b"])
    if use_pallas and _fused_block_fits(h):
        h = _cbam_segment_pallas(h, w1, w2)
    else:
        # TODO(synk): spatially-tiled fused kernel (2-axis grid, 'arbitrary'
        # spatial axis with pl.when-guarded sum/max accumulators + a second
        # apply pass) for images whose C*H*W working set exceeds the per-block
        # VMEM budget; plain XLA ops are used until then.
        h = _cbam_segment_ref(h, w1, w2)
    h = _conv3x3(h, params["conv2_w"], params["conv2_b"])
    h = _instance_norm(h)
    return x + h


if __name__ == "__main__":
    # dim must be >= 8 (hidden = dim // 8).
    B, C, H, W = 2, 32, 16, 16
    Ch = C // 8

    key = jax.random.PRNGKey(0)
    ks = jax.random.split(key, 6)
    x = jax.random.normal(ks[0], (B, C, H, W), dtype=jnp.float32)
    params = {
        # torch-native Linear weight layouts:
        "ca_w1": 0.1 * jax.random.normal(ks[1], (Ch, C), dtype=jnp.float32),
        "ca_w2": 0.1 * jax.random.normal(ks[2], (C, Ch), dtype=jnp.float32),
        "conv1_w": 0.05 * jax.random.normal(ks[3], (C, C, 3, 3), dtype=jnp.float32),
        "conv1_b": 0.01 * jax.random.normal(ks[4], (C,), dtype=jnp.float32),
        "conv2_w": 0.05 * jax.random.normal(ks[5], (C, C, 3, 3), dtype=jnp.float32),
        "conv2_b": jnp.zeros((C,), dtype=jnp.float32),
    }
    w1, w2 = params["ca_w1"], params["ca_w2"]

    ca_pallas = jax.jit(channel_attention_forward)
    seg_pallas = jax.jit(_cbam_segment_pallas)
    fwd_pallas = jax.jit(lambda xx, pp: resnet_block_cbam3_forward(xx, pp, True))

    # 1) Standalone channel-attention kernel vs. reference (both spatial sizes
    #    the module's CA actually sees: 16x16 and the padded 18x18 map).
    for (hh, ww) in [(H, W), (H + 2, W + 2)]:
        xt = jax.random.normal(ks[0], (B, C, hh, ww), dtype=jnp.float32)
        got = jax.block_until_ready(ca_pallas(xt, w1, w2))
        want = channel_attention_ref(xt, w1, w2)
        assert got.shape == xt.shape
        assert jnp.allclose(got, want, atol=1e-5, rtol=1e-5)

    # 2) Fused IN+ReLU+CA+pad+CA segment vs. the step-by-step reference.
    h0 = _conv3x3(_reflect_pad(x), params["conv1_w"], params["conv1_b"])
    got_seg = jax.block_until_ready(seg_pallas(h0, w1, w2))
    ref_seg = _cbam_segment_ref(h0, w1, w2)
    assert got_seg.shape == ref_seg.shape
    assert jnp.allclose(got_seg, ref_seg, atol=1e-4, rtol=1e-4)

    # 3) Full ResnetBlock_with_cbam_3 forward: Pallas fused segment vs. pure JAX.
    out = jax.block_until_ready(fwd_pallas(x, params))
    ref = resnet_block_cbam3_forward(x, params, use_pallas=False)
    assert out.shape == (B, C, H, W)
    assert jnp.allclose(out, ref, atol=1e-4, rtol=1e-4)

    print("KERNEL_OK")
</pallas_src>

<mosaic_0001>
module attributes {stable_mosaic.version = 11 : i64} {
  func.func @_channel_attention_kernel(%arg0: i32, %arg1: memref<2x32x256xf32, #tpu.memory_space<vmem>>, %arg2: memref<32x4xf32, #tpu.memory_space<vmem>>, %arg3: memref<4x32xf32, #tpu.memory_space<vmem>>, %arg4: memref<2x32x256xf32, #tpu.memory_space<vmem>>) attributes {dimension_semantics = [#tpu.dimension_semantics<parallel>], iteration_bounds = array<i64: 1>, scalar_prefetch = 0 : i64, scratch_operands = 0 : i64, tpu.core_type = #tpu.core_type<tc>, window_params = [{transform_indices = @transform_0, window_bounds = array<i64: 2, 32, 256>}, {pipeline_mode = #tpu.pipeline_mode<synchronous>, transform_indices = @transform_1, window_bounds = array<i64: 32, 4>}, {pipeline_mode = #tpu.pipeline_mode<synchronous>, transform_indices = @transform_2, window_bounds = array<i64: 4, 32>}, {transform_indices = @transform_3, window_bounds = array<i64: 2, 32, 256>}]} {
    %c0 = arith.constant 0 : index
    %c0_0 = arith.constant 0 : index
    %c0_1 = arith.constant 0 : index
    %0 = vector.load %arg1[%c0, %c0_0, %c0_1] : memref<2x32x256xf32, #tpu.memory_space<vmem>>, vector<2x32x256xf32>
    %cst = arith.constant dense<0.000000e+00> : vector<2x32xf32>
    %1 = vector.multi_reduction <add>, %0, %cst [2] : vector<2x32x256xf32> to vector<2x32xf32>
    %cst_2 = arith.constant 2.560000e+02 : f32
    %2 = vector.broadcast %cst_2 : f32 to vector<2x32xf32>
    %3 = arith.divf %1, %2 : vector<2x32xf32>
    %c0_3 = arith.constant 0 : index
    %c0_4 = arith.constant 0 : index
    %c0_5 = arith.constant 0 : index
    %4 = vector.load %arg1[%c0_3, %c0_4, %c0_5] : memref<2x32x256xf32, #tpu.memory_space<vmem>>, vector<2x32x256xf32>
    %cst_6 = arith.constant dense<0xFF800000> : vector<2x32xf32>
    %5 = vector.multi_reduction <maximumf>, %4, %cst_6 [2] : vector<2x32x256xf32> to vector<2x32xf32>
    %c0_7 = arith.constant 0 : index
    %c0_8 = arith.constant 0 : index
    %6 = vector.load %arg2[%c0_7, %c0_8] : memref<32x4xf32, #tpu.memory_space<vmem>>, vector<32x4xf32>
    %cst_9 = arith.constant dense<0.000000e+00> : vector<2x4xf32>
    %7 = tpu.matmul %3, %6, %cst_9 {dimension_numbers = #tpu.dot_dimension_numbers<[1], [0], [0], [1], [0, 0, 1, 1], [], []>} : vector<2x32xf32>, vector<32x4xf32>, vector<2x4xf32> -> vector<2x4xf32>
    %cst_10 = arith.constant 0.000000e+00 : f32
    %8 = vector.broadcast %cst_10 : f32 to vector<2x4xf32>
    %9 = arith.maximumf %7, %8 : vector<2x4xf32>
    %c0_11 = arith.constant 0 : index
    %c0_12 = arith.constant 0 : index
    %10 = vector.load %arg2[%c0_11, %c0_12] : memref<32x4xf32, #tpu.memory_space<vmem>>, vector<32x4xf32>
    %cst_13 = arith.constant dense<0.000000e+00> : vector<2x4xf32>
    %11 = tpu.matmul %5, %10, %cst_13 {dimension_numbers = #tpu.dot_dimension_numbers<[1], [0], [0], [1], [0, 0, 1, 1], [], []>} : vector<2x32xf32>, vector<32x4xf32>, vector<2x4xf32> -> vector<2x4xf32>
    %cst_14 = arith.constant 0.000000e+00 : f32
    %12 = vector.broadcast %cst_14 : f32 to vector<2x4xf32>
    %13 = arith.maximumf %11, %12 : vector<2x4xf32>
    %14 = arith.addf %9, %13 : vector<2x4xf32>
    %c0_15 = arith.constant 0 : index
    %c0_16 = arith.constant 0 : index
    %15 = vector.load %arg3[%c0_15, %c0_16] : memref<4x32xf32, #tpu.memory_space<vmem>>, vector<4x32xf32>
    %cst_17 = arith.constant dense<0.000000e+00> : vector<2x32xf32>
    %16 = tpu.matmul %14, %15, %cst_17 {dimension_numbers = #tpu.dot_dimension_numbers<[1], [0], [0], [1], [0, 0, 1, 1], [], []>} : vector<2x4xf32>, vector<4x32xf32>, vector<2x32xf32> -> vector<2x32xf32>
    %17 = arith.negf %16 : vector<2x32xf32>
    %18 = math.exp %17 : vector<2x32xf32>
    %cst_18 = arith.constant 1.000000e+00 : f32
    %19 = vector.broadcast %cst_18 : f32 to vector<2x32xf32>
    %20 = arith.addf %19, %18 : vector<2x32xf32>
    %21 = arith.divf %19, %20 : vector<2x32xf32>
    %c0_19 = arith.constant 0 : index
    %c0_20 = arith.constant 0 : index
    %c0_21 = arith.constant 0 : index
    %22 = vector.load %arg1[%c0_19, %c0_20, %c0_21] : memref<2x32x256xf32, #tpu.memory_space<vmem>>, vector<2x32x256xf32>
    %23 = vector.shape_cast %21 : vector<2x32xf32> to vector<2x32x1xf32>
    %24 = vector.broadcast %23 : vector<2x32x1xf32> to vector<2x32x256xf32>
    %25 = arith.mulf %22, %24 : vector<2x32x256xf32>
    %c0_22 = arith.constant 0 : index
    %c0_23 = arith.constant 0 : index
    %c0_24 = arith.constant 0 : index
    %26 = vector.load %arg4[%c0_22, %c0_23, %c0_24] : memref<2x32x256xf32, #tpu.memory_space<vmem>>, vector<2x32x256xf32>
    tpu.vector_store %arg4[%c0_22, %c0_23, %c0_24], %25 {strides = array<i32>} : memref<2x32x256xf32, #tpu.memory_space<vmem>>, vector<2x32x256xf32>,
    return
  }
  func.func @transform_0(%arg0: i32) -> (i32, i32, i32) {
    %c0_i32 = arith.constant 0 : i32
    %c0_i32_0 = arith.constant 0 : i32
    %c0_i32_1 = arith.constant 0 : i32
    return %arg0, %c0_i32, %c0_i32_0 : i32, i32, i32
  }
  func.func @transform_1(%arg0: i32) -> (i32, i32) {
    %c0_i32 = arith.constant 0 : i32
    %c0_i32_0 = arith.constant 0 : i32
    %c0_i32_1 = arith.constant 0 : i32
    return %c0_i32, %c0_i32_0 : i32, i32
  }
  func.func @transform_2(%arg0: i32) -> (i32, i32) {
    %c0_i32 = arith.constant 0 : i32
    %c0_i32_0 = arith.constant 0 : i32
    %c0_i32_1 = arith.constant 0 : i32
    return %c0_i32, %c0_i32_0 : i32, i32
  }
  func.func @transform_3(%arg0: i32) -> (i32, i32, i32) {
    %c0_i32 = arith.constant 0 : i32
    %c0_i32_0 = arith.constant 0 : i32
    %c0_i32_1 = arith.constant 0 : i32
    return %arg0, %c0_i32, %c0_i32_0 : i32, i32, i32
  }
}

</mosaic_0001>

<llo_original>
// kernel: channel_attention_forward.1
$region0: #{channel_attention_forward.1}
  #allocation0 [shape = 'u32[]', space=smem, size = 0x4, offset = 0x4, fixed_abs, tag = 'smem constant byte address 0x4 - core index']
  #allocation1 [shape = 'u32[144,128]{1,0:T(1,128)}', space=vmem, size = 0x12000, scoped, tag = 'internal scratch']
  %s0 = inlined_call_operand.hbm [shape: f32[2,32,256], index: 0, kind: input, shape index: {}, may-alias: {0,3}]
  %s1 = inlined_call_operand.hbm [shape: f32[32,4], index: 1, kind: input, shape index: {}]
  %s2 = inlined_call_operand.hbm [shape: f32[4,32], index: 2, kind: input, shape index: {}]
  %s3 = inlined_call_operand.hbm [shape: f32[2,32,256], index: 3, kind: output, shape index: {}, may-alias: {0,3}]
  %s4 = sld [smem:[#allocation0]]
  $region34: #{channel_attention_forward.1} parent=0
    _
  %s6 = ssub.s32 1, %s4
  %s7 = scalar_select 0, %s6, %s4
  $region1: #{channel_attention_forward.1} parent=0
    #allocation2 [shape = 'u8[65536]{0}', space=vmem, size = 0x10000, scoped, tag = 'input window, operand 0, single buffered']
    #allocation3 [shape = 's32[1]{0}', space=sflag, size = 0x4, scoped, tag = 'scoped memory for channel_attention_forward.1']
    #allocation4 [shape = 's32[1]{0}', space=sflag, size = 0x4, scoped, tag = 'scoped memory for channel_attention_forward.1']
    #allocation5 [shape = 'u8[16384]{0}', space=vmem, size = 0x4000, scoped, tag = 'input window, operand 1, single buffered']
    #allocation6 [shape = 's32[1]{0}', space=sflag, size = 0x4, scoped, tag = 'scoped memory for channel_attention_forward.1']
    #allocation7 [shape = 'u8[2048]{0}', space=vmem, size = 0x800, scoped, tag = 'input window, operand 2, single buffered']
    #allocation8 [shape = 'u8[65536]{0}', space=vmem, size = 0x10000, scoped, tag = 'output window, operand 0, single buffered']
    %8 = vsyncpa [#allocation3], 0
    %9 = vsyncpa [#allocation6], 0
    %10 = vsyncpa [#allocation4], 0
    // Predicated region
    $region2: #{channel_attention_forward.1} parent=1 // pred_check
      _
    $region3: #{channel_attention_forward.1} parent=1 // pred_check_branch
      %12 = sbr.rel (0) target = $region5
    $region4: #{channel_attention_forward.1} parent=1 // pred_region
      %s14 = ssub.s32 2048, 2048
      %15 = vsyncadd [#allocation3], %s14
      %s16 = sshll.u32 [#allocation2], 4
      %s17 = int_to_ptr.vmem [resolvable:$true] %s16
      %22 = dma.hbm_to_vmem [thread:$0]  %s0, 2048, %s17, [#allocation3], 256, 256, 16
    $region5: #{channel_attention_forward.1} parent=1 // pred_fallthru
      _
    // Predicated region
    $region6: #{channel_attention_forward.1} parent=1 // pred_check
      _
    $region7: #{channel_attention_forward.1} parent=1 // pred_check_branch
      %24 = sbr.rel (0) target = $region9
    $region8: #{channel_attention_forward.1} parent=1 // pred_region
      %s26 = ssub.s32 512, 512
      %27 = vsyncadd [#allocation6], %s26
      %s28 = sshll.u32 [#allocation5], 4
      %s29 = int_to_ptr.vmem [resolvable:$true] %s28
      %34 = dma.hbm_to_vmem [thread:$0]  %s1, 512, %s29, [#allocation6], 128, 128, 8
    $region9: #{channel_attention_forward.1} parent=1 // pred_fallthru
      _
    // Predicated region
    $region10: #{channel_attention_forward.1} parent=1 // pred_check
      _
    $region11: #{channel_attention_forward.1} parent=1 // pred_check_branch
      %36 = sbr.rel (0) target = $region13
    $region12: #{channel_attention_forward.1} parent=1 // pred_region
      %s38 = ssub.s32 64, 64
      %39 = vsyncadd [#allocation6], %s38
      %s41 = sshll.u32 [#allocation7], 4
      %s42 = int_to_ptr.vmem [resolvable:$true] %s41
      %44 = dma.hbm_to_vmem [thread:$0]  %s2, 64, %s42, [#allocation6]
    $region13: #{channel_attention_forward.1} parent=1 // pred_fallthru
      _
    // Predicated region
    $region14: #{channel_attention_forward.1} parent=1 // pred_check
      _
    $region15: #{channel_attention_forward.1} parent=1 // pred_check_branch
      %46 = sbr.rel (0) target = $region17
    $region16: #{channel_attention_forward.1} parent=1 // pred_region
      %47 = dma.done [#allocation3], 2048
    $region17: #{channel_attention_forward.1} parent=1 // pred_fallthru
      _
    // Predicated region
    $region18: #{channel_attention_forward.1} parent=1 // pred_check
      _
    $region19: #{channel_attention_forward.1} parent=1 // pred_check_branch
      %49 = sbr.rel (0) target = $region21
    $region20: #{channel_attention_forward.1} parent=1 // pred_region
      %50 = dma.done [#allocation6], 512
    $region21: #{channel_attention_forward.1} parent=1 // pred_fallthru
      _
    // Predicated region
    $region22: #{channel_attention_forward.1} parent=1 // pred_check
      _
    $region23: #{channel_attention_forward.1} parent=1 // pred_check_branch
      %52 = sbr.rel (0) target = $region25
    $region24: #{channel_attention_forward.1} parent=1 // pred_region
      %53 = dma.done [#allocation6], 64
    $region25: #{channel_attention_forward.1} parent=1 // pred_fallthru
      _
    %v54 = vld [vmem:[#allocation2] sm:$0xff]
    %v55 = vld [vmem:[#allocation2 + $0x8] sm:$0xff]
    %v56 = vld [vmem:[#allocation2 + $0x10] sm:$0xff]
    %v57 = vld [vmem:[#allocation2 + $0x18] sm:$0xff]
    %v58 = vld [vmem:[#allocation2 + $0x20] sm:$0xff]
    %v59 = vld [vmem:[#allocation2 + $0x28] sm:$0xff]
    %v60 = vld [vmem:[#allocation2 + $0x30] sm:$0xff]
    %v61 = vld [vmem:[#allocation2 + $0x38] sm:$0xff]
    %v62 = vld [vmem:[#allocation2 + $0x40] sm:$0xff]
    %v63 = vld [vmem:[#allocation2 + $0x48] sm:$0xff]
    %v64 = vld [vmem:[#allocation2 + $0x50] sm:$0xff]
    %v65 = vld [vmem:[#allocation2 + $0x58] sm:$0xff]
    %v66 = vld [vmem:[#allocation2 + $0x60] sm:$0xff]
    %v67 = vld [vmem:[#allocation2 + $0x68] sm:$0xff]
    %v68 = vld [vmem:[#allocation2 + $0x70] sm:$0xff]
    %v69 = vld [vmem:[#allocation2 + $0x78] sm:$0xff]
    %v70 = vadd.f32 %v54, %v55
    %71 = vadd.xlane.f32.xlu0 %v70
    %v72 = vpop.xlane.xlu0 %71
    %v73 = vadd.f32 %v56, %v57
    %74 = vadd.xlane.f32.xlu0 %v73
    %v75 = vpop.xlane.xlu0 %74
    %v76 = vadd.f32 %v58, %v59
    %77 = vadd.xlane.f32.xlu0 %v76
    %v78 = vpop.xlane.xlu0 %77
    %v79 = vadd.f32 %v60, %v61
    %80 = vadd.xlane.f32.xlu0 %v79
    %v81 = vpop.xlane.xlu0 %80
    %v82 = vadd.f32 %v62, %v63
    %83 = vadd.xlane.f32.xlu0 %v82
    %v84 = vpop.xlane.xlu0 %83
    %v85 = vadd.f32 %v64, %v65
    %86 = vadd.xlane.f32.xlu0 %v85
    %v87 = vpop.xlane.xlu0 %86
    %v88 = vadd.f32 %v66, %v67
    %89 = vadd.xlane.f32.xlu0 %v88
    %v90 = vpop.xlane.xlu0 %89
    %v91 = vadd.f32 %v68, %v69
    %92 = vadd.xlane.f32.xlu0 %v91
    %v93 = vpop.xlane.xlu0 %92
    %v94 = vrcp.pop 256.0
    %v95 = vmul.f32 %v72, %v94
    %v96 = vmul.f32 %v75, %v94
    %v97 = vmul.f32 %v78, %v94
    %v98 = vmul.f32 %v81, %v94
    %v99 = vmul.f32 %v84, %v94
    %v100 = vmul.f32 %v87, %v94
    %v101 = vmul.f32 %v90, %v94
    %v102 = vmul.f32 %v93, %v94
    %v103 = vmax.f32 %v54, %v55
    %104 = vmax.xlane.f32.xlu0 %v103
    %v105 = vpop.xlane.xlu0 %104
    %v106 = vmax.f32 %v56, %v57
    %107 = vmax.xlane.f32.xlu0 %v106
    %v108 = vpop.xlane.xlu0 %107
    %v109 = vmax.f32 %v58, %v59
    %110 = vmax.xlane.f32.xlu0 %v109
    %v111 = vpop.xlane.xlu0 %110
    %v112 = vmax.f32 %v60, %v61
    %113 = vmax.xlane.f32.xlu0 %v112
    %v114 = vpop.xlane.xlu0 %113
    %v115 = vmax.f32 %v62, %v63
    %116 = vmax.xlane.f32.xlu0 %v115
    %v117 = vpop.xlane.xlu0 %116
    %v118 = vmax.f32 %v64, %v65
    %119 = vmax.xlane.f32.xlu0 %v118
    %v120 = vpop.xlane.xlu0 %119
    %v121 = vmax.f32 %v66, %v67
    %122 = vmax.xlane.f32.xlu0 %v121
    %v123 = vpop.xlane.xlu0 %122
    %v124 = vmax.f32 %v68, %v69
    %125 = vmax.xlane.f32.xlu0 %v124
    %v126 = vpop.xlane.xlu0 %125
    %v127 = vld [vmem:[#allocation5] sm:$0xff]
    %v128 = vld [vmem:[#allocation5 + $0x8] sm:$0xff]
    %v129 = vld [vmem:[#allocation5 + $0x10] sm:$0xff]
    %v130 = vld [vmem:[#allocation5 + $0x18] sm:$0xff]
    %v139 = vlaneseq
    %v140 = vand.u32 %v139, 127
    %v141 = vlaneseq
    %v142 = vshrl.u32 %v141, 7
    %v143 = vsub.s32 %v140, %v142
    %v144 = vrot.slane %v95, %v143
    %v145 = vadd.s32 %v140, 4294967288
    %v146 = vlaneseq
    %v147 = vshrl.u32 %v146, 7
    %v148 = vsub.s32 %v145, %v147
    %v149 = vrot.slane %v96, %v148
    %vm150 = vcmask 130112
    %v151 = vsel %vm150, %v149, %v144
    %v152 = vadd.s32 %v140, 4294967280
    %v153 = vlaneseq
    %v154 = vshrl.u32 %v153, 7
    %v155 = vsub.s32 %v152, %v154
    %v156 = vrot.slane %v97, %v155
    %vm157 = vcmask 195712
    %v158 = vsel %vm157, %v156, %v151
    %v159 = vadd.s32 %v140, 4294967272
    %v160 = vlaneseq
    %v161 = vshrl.u32 %v160, 7
    %v162 = vsub.s32 %v159, %v161
    %v163 = vrot.slane %v98, %v162
    %vm164 = vcmask 261312
    %v165 = vsel %vm164, %v163, %v158
    %v166 = vlaneseq
    %v167 = vshrl.u32 %v166, 7
    %v168 = vsub.s32 %v140, %v167
    %v169 = vrot.slane %v99, %v168
    %v170 = vlaneseq
    %v171 = vshrl.u32 %v170, 7
    %v172 = vsub.s32 %v145, %v171
    %v173 = vrot.slane %v100, %v172
    %v174 = vsel %vm150, %v173, %v169
    %v175 = vlaneseq
    %v176 = vshrl.u32 %v175, 7
    %v177 = vsub.s32 %v152, %v176
    %v178 = vrot.slane %v101, %v177
    %v179 = vsel %vm157, %v178, %v174
    %v180 = vlaneseq
    %v181 = vshrl.u32 %v180, 7
    %v182 = vsub.s32 %v159, %v181
    %v183 = vrot.slane %v102, %v182
    %v184 = vsel %vm164, %v183, %v179
    %vm185 = vcmask 1041409
    %v186 = vsel %vm185, %v184, %v165
    %vm187 = vcmask 261120
    %v188 = vsel %vm187, %v186, 0
    %190 = vmatprep.subr.mxu0 0.0
    %191 = vmatpush1.msra.mxu0 %v127
    %192 = vmatprep.subr.mxu0 0.0
    %193 = vmatpush1.msra.mxu0 %v128
    %194 = vmatprep.subr.mxu0 0.0
    %195 = vmatpush1.msra.mxu0 %v129
    %196 = vmatprep.subr.mxu0 0.0
    %197 = vmatpush1.msra.mxu0 %v130
    %198 = vmatprep.subr.mxu0 0.0
    %199 = vmatpush1.msra.mxu0 0.0
    %200 = vmatprep.subr.mxu0 0.0
    %201 = vmatpush1.msra.mxu0 0.0
    %202 = vmatprep.subr.mxu0 0.0
    %203 = vmatpush1.msra.mxu0 0.0
    %204 = vmatprep.subr.mxu0 0.0
    %205 = vmatpush1.msra.mxu0 0.0
    %206 = vmatprep.subr.mxu0 0.0
    %207 = vmatpush1.msra.mxu0 0.0
    %208 = vmatprep.subr.mxu0 0.0
    %209 = vmatpush1.msra.mxu0 0.0
    %210 = vmatprep.subr.mxu0 0.0
    %211 = vmatpush1.msra.mxu0 0.0
    %212 = vmatprep.subr.mxu0 0.0
    %213 = vmatpush1.msra.mxu0 0.0
    %214 = vmatprep.subr.mxu0 0.0
    %215 = vmatpush1.msra.mxu0 0.0
    %216 = vmatprep.subr.mxu0 0.0
    %217 = vmatpush1.msra.mxu0 0.0
    %218 = vmatprep.subr.mxu0 0.0
    %219 = vmatpush1.msra.mxu0 0.0
    %220 = vmatprep.subr.mxu0 0.0
    %221 = vmatpush1.msra.mxu0 0.0
    %222 = vmatprep.subr.mxu0 0.0
    %223 = vmatpush1.msra.mxu0 0.0
    %224 = vmatprep.subr.mxu0 0.0
    %225 = vmatpush1.msra.mxu0 0.0
    %226 = vmatprep.subr.mxu0 0.0
    %227 = vmatpush1.msra.mxu0 0.0
    %228 = vmatprep.subr.mxu0 0.0
    %229 = vmatpush1.msra.mxu0 0.0
    %230 = vmatprep.subr.mxu0 0.0
    %231 = vmatpush1.msra.mxu0 0.0
    %232 = vmatprep.subr.mxu0 0.0
    %233 = vmatpush1.msra.mxu0 0.0
    %234 = vmatprep.subr.mxu0 0.0
    %235 = vmatpush1.msra.mxu0 0.0
    %236 = vmatprep.subr.mxu0 0.0
    %237 = vmatpush1.msra.mxu0 0.0
    %238 = vmatprep.subr.mxu0 0.0
    %239 = vmatpush1.msra.mxu0 0.0
    %240 = vmatprep.subr.mxu0 0.0
    %241 = vmatpush1.msra.mxu0 0.0
    %242 = vmatprep.subr.mxu0 0.0
    %243 = vmatpush1.msra.mxu0 0.0
    %244 = vmatprep.subr.mxu0 0.0
    %245 = vmatpush1.msra.mxu0 0.0
    %246 = vmatprep.subr.mxu0 0.0
    %247 = vmatpush1.msra.mxu0 0.0
    %248 = vmatprep.subr.mxu0 0.0
    %249 = vmatpush1.msra.mxu0 0.0
    %250 = vmatprep.subr.mxu0 0.0
    %251 = vmatpush1.msra.mxu0 0.0
    %252 = vmatprep.subr.mxu0 0.0
    %253 = vmatpush1.msra.mxu0 0.0
    %254 = vmatprep.mubr.f32.mxu0 0.0
    %255 = vmatmul.mubr.f32.gmra.mrb[0].mxu0 %v188
    %v256 = vpop.f32.mrb[0].mxu0
    %v257 = vadd.f32 0.0, %v256
    %v258 = vpop.f32.mrb[0].mxu0
    %259 = vdwg.mxu0
    %v260 = vmax.f32 %v257, 0.0
    %v269 = vlaneseq
    %v270 = vshrl.u32 %v269, 7
    %v271 = vsub.s32 %v140, %v270
    %v272 = vrot.slane %v105, %v271
    %v273 = vlaneseq
    %v274 = vshrl.u32 %v273, 7
    %v275 = vsub.s32 %v145, %v274
    %v276 = vrot.slane %v108, %v275
    %v277 = vsel %vm150, %v276, %v272
    %v278 = vlaneseq
    %v279 = vshrl.u32 %v278, 7
    %v280 = vsub.s32 %v152, %v279
    %v281 = vrot.slane %v111, %v280
    %v282 = vsel %vm157, %v281, %v277
    %v283 = vlaneseq
    %v284 = vshrl.u32 %v283, 7
    %v285 = vsub.s32 %v159, %v284
    %v286 = vrot.slane %v114, %v285
    %v287 = vsel %vm164, %v286, %v282
    %v288 = vlaneseq
    %v289 = vshrl.u32 %v288, 7
    %v290 = vsub.s32 %v140, %v289
    %v291 = vrot.slane %v117, %v290
    %v292 = vlaneseq
    %v293 = vshrl.u32 %v292, 7
    %v294 = vsub.s32 %v145, %v293
    %v295 = vrot.slane %v120, %v294
    %v296 = vsel %vm150, %v295, %v291
    %v297 = vlaneseq
    %v298 = vshrl.u32 %v297, 7
    %v299 = vsub.s32 %v152, %v298
    %v300 = vrot.slane %v123, %v299
    %v301 = vsel %vm157, %v300, %v296
    %v302 = vlaneseq
    %v303 = vshrl.u32 %v302, 7
    %v304 = vsub.s32 %v159, %v303
    %v305 = vrot.slane %v126, %v304
    %v306 = vsel %vm164, %v305, %v301
    %v307 = vsel %vm185, %v306, %v287
    %v308 = vsel %vm187, %v307, 0
    %310 = vmatprep.subr.mxu0 0.0
    %311 = vmatpush1.msra.mxu0 %v127
    %312 = vmatprep.subr.mxu0 0.0
    %313 = vmatpush1.msra.mxu0 %v128
    %314 = vmatprep.subr.mxu0 0.0
    %315 = vmatpush1.msra.mxu0 %v129
    %316 = vmatprep.subr.mxu0 0.0
    %317 = vmatpush1.msra.mxu0 %v130
    %318 = vmatprep.subr.mxu0 0.0
    %319 = vmatpush1.msra.mxu0 0.0
    %320 = vmatprep.subr.mxu0 0.0
    %321 = vmatpush1.msra.mxu0 0.0
    %322 = vmatprep.subr.mxu0 0.0
    %323 = vmatpush1.msra.mxu0 0.0
    %324 = vmatprep.subr.mxu0 0.0
    %325 = vmatpush1.msra.mxu0 0.0
    %326 = vmatprep.subr.mxu0 0.0
    %327 = vmatpush1.msra.mxu0 0.0
    %328 = vmatprep.subr.mxu0 0.0
    %329 = vmatpush1.msra.mxu0 0.0
    %330 = vmatprep.subr.mxu0 0.0
    %331 = vmatpush1.msra.mxu0 0.0
    %332 = vmatprep.subr.mxu0 0.0
    %333 = vmatpush1.msra.mxu0 0.0
    %334 = vmatprep.subr.mxu0 0.0
    %335 = vmatpush1.msra.mxu0 0.0
    %336 = vmatprep.subr.mxu0 0.0
    %337 = vmatpush1.msra.mxu0 0.0
    %338 = vmatprep.subr.mxu0 0.0
    %339 = vmatpush1.msra.mxu0 0.0
    %340 = vmatprep.subr.mxu0 0.0
    %341 = vmatpush1.msra.mxu0 0.0
    %342 = vmatprep.subr.mxu0 0.0
    %343 = vmatpush1.msra.mxu0 0.0
    %344 = vmatprep.subr.mxu0 0.0
    %345 = vmatpush1.msra.mxu0 0.0
    %346 = vmatprep.subr.mxu0 0.0
    %347 = vmatpush1.msra.mxu0 0.0
    %348 = vmatprep.subr.mxu0 0.0
    %349 = vmatpush1.msra.mxu0 0.0
    %350 = vmatprep.subr.mxu0 0.0
    %351 = vmatpush1.msra.mxu0 0.0
    %352 = vmatprep.subr.mxu0 0.0
    %353 = vmatpush1.msra.mxu0 0.0
    %354 = vmatprep.subr.mxu0 0.0
    %355 = vmatpush1.msra.mxu0 0.0
    %356 = vmatprep.subr.mxu0 0.0
    %357 = vmatpush1.msra.mxu0 0.0
    %358 = vmatprep.subr.mxu0 0.0
    %359 = vmatpush1.msra.mxu0 0.0
    %360 = vmatprep.subr.mxu0 0.0
    %361 = vmatpush1.msra.mxu0 0.0
    %362 = vmatprep.subr.mxu0 0.0
    %363 = vmatpush1.msra.mxu0 0.0
    %364 = vmatprep.subr.mxu0 0.0
    %365 = vmatpush1.msra.mxu0 0.0
    %366 = vmatprep.subr.mxu0 0.0
    %367 = vmatpush1.msra.mxu0 0.0
    %368 = vmatprep.subr.mxu0 0.0
    %369 = vmatpush1.msra.mxu0 0.0
    %370 = vmatprep.subr.mxu0 0.0
    %371 = vmatpush1.msra.mxu0 0.0
    %372 = vmatprep.subr.mxu0 0.0
    %373 = vmatpush1.msra.mxu0 0.0
    %374 = vmatprep.mubr.f32.mxu0 0.0
    %375 = vmatmul.mubr.f32.gmra.mrb[0].mxu0 %v308
    %v376 = vpop.f32.mrb[0].mxu0
    %v377 = vadd.f32 0.0, %v376
    %v378 = vpop.f32.mrb[0].mxu0
    %379 = vdwg.mxu0
    %v380 = vmax.f32 %v377, 0.0
    %v381 = vadd.f32 %v260, %v380
    %v382 = vld [vmem:[#allocation7] sm:$0xf]
    %vm383 = vcmask 31744
    %v385 = vsel %vm383, %v381, 0
    %vm387 = vcmask 1043456
    %v389 = vsel %vm387, %v382, 0
    %391 = vmatprep.subr.mxu0 0.0
    %392 = vmatpush1.msra.mxu0 %v389
    %393 = vmatprep.subr.mxu0 0.0
    %394 = vmatpush1.msra.mxu0 0.0
    %395 = vmatprep.subr.mxu0 0.0
    %396 = vmatpush1.msra.mxu0 0.0
    %397 = vmatprep.subr.mxu0 0.0
    %398 = vmatpush1.msra.mxu0 0.0
    %399 = vmatprep.subr.mxu0 0.0
    %400 = vmatpush1.msra.mxu0 0.0
    %401 = vmatprep.subr.mxu0 0.0
    %402 = vmatpush1.msra.mxu0 0.0
    %403 = vmatprep.subr.mxu0 0.0
    %404 = vmatpush1.msra.mxu0 0.0
    %405 = vmatprep.subr.mxu0 0.0
    %406 = vmatpush1.msra.mxu0 0.0
    %407 = vmatprep.subr.mxu0 0.0
    %408 = vmatpush1.msra.mxu0 0.0
    %409 = vmatprep.subr.mxu0 0.0
    %410 = vmatpush1.msra.mxu0 0.0
    %411 = vmatprep.subr.mxu0 0.0
    %412 = vmatpush1.msra.mxu0 0.0
    %413 = vmatprep.subr.mxu0 0.0
    %414 = vmatpush1.msra.mxu0 0.0
    %415 = vmatprep.subr.mxu0 0.0
    %416 = vmatpush1.msra.mxu0 0.0
    %417 = vmatprep.subr.mxu0 0.0
    %418 = vmatpush1.msra.mxu0 0.0
    %419 = vmatprep.subr.mxu0 0.0
    %420 = vmatpush1.msra.mxu0 0.0
    %421 = vmatprep.subr.mxu0 0.0
    %422 = vmatpush1.msra.mxu0 0.0
    %423 = vmatprep.subr.mxu0 0.0
    %424 = vmatpush1.msra.mxu0 0.0
    %425 = vmatprep.subr.mxu0 0.0
    %426 = vmatpush1.msra.mxu0 0.0
    %427 = vmatprep.subr.mxu0 0.0
    %428 = vmatpush1.msra.mxu0 0.0
    %429 = vmatprep.subr.mxu0 0.0
    %430 = vmatpush1.msra.mxu0 0.0
    %431 = vmatprep.subr.mxu0 0.0
    %432 = vmatpush1.msra.mxu0 0.0
    %433 = vmatprep.subr.mxu0 0.0
    %434 = vmatpush1.msra.mxu0 0.0
    %435 = vmatprep.subr.mxu0 0.0
    %436 = vmatpush1.msra.mxu0 0.0
    %437 = vmatprep.subr.mxu0 0.0
    %438 = vmatpush1.msra.mxu0 0.0
    %439 = vmatprep.subr.mxu0 0.0
    %440 = vmatpush1.msra.mxu0 0.0
    %441 = vmatprep.subr.mxu0 0.0
    %442 = vmatpush1.msra.mxu0 0.0
    %443 = vmatprep.subr.mxu0 0.0
    %444 = vmatpush1.msra.mxu0 0.0
    %445 = vmatprep.subr.mxu0 0.0
    %446 = vmatpush1.msra.mxu0 0.0
    %447 = vmatprep.subr.mxu0 0.0
    %448 = vmatpush1.msra.mxu0 0.0
    %449 = vmatprep.subr.mxu0 0.0
    %450 = vmatpush1.msra.mxu0 0.0
    %451 = vmatprep.subr.mxu0 0.0
    %452 = vmatpush1.msra.mxu0 0.0
    %453 = vmatprep.subr.mxu0 0.0
    %454 = vmatpush1.msra.mxu0 0.0
    %455 = vmatprep.mubr.f32.mxu0 0.0
    %456 = vmatmul.mubr.f32.gmra.mrb[0].mxu0 %v385
    %v457 = vpop.f32.mrb[0].mxu0
    %v458 = vadd.f32 0.0, %v457
    %v459 = vpop.f32.mrb[0].mxu0
    %460 = vdwg.mxu0
    %v461 = vxor.u32 %v458, 2147483648
    %v462 = vmul.f32 %v461, 1.442695
    %v463 = vpow.pop %v462
    %v464 = vadd.f32 %v463, 1.0
    %v465 = vrcp.pop %v464
    %v466 = vmul.f32 1.0, %v465
    %v467 = vlaneseq
    %v468 = vshrl.u32 %v467, 7
    %v469 = vsub.s32 0, %v468
    %v470 = vrot.slane %v466, %v469
    %472 = vbcast.lane.b32.xlu0 %v470, 256
    %v473 = vpop.permute.xlu0 %472
    %s475 = sor.u32 256, 8
    %476 = vbcast.lane.b32.xlu0 %v470, %s475
    %v477 = vpop.permute.xlu0 %476
    %s479 = sor.u32 256, 16
    %480 = vbcast.lane.b32.xlu0 %v470, %s479
    %v481 = vpop.permute.xlu0 %480
    %s483 = sor.u32 256, 24
    %484 = vbcast.lane.b32.xlu0 %v470, %s483
    %v485 = vpop.permute.xlu0 %484
    %v486 = vlaneseq
    %v487 = vshrl.u32 %v486, 7
    %v488 = vsub.s32 1, %v487
    %v489 = vrot.slane %v466, %v488
    %491 = vbcast.lane.b32.xlu0 %v489, 256
    %v492 = vpop.permute.xlu0 %491
    %s494 = sor.u32 256, 8
    %495 = vbcast.lane.b32.xlu0 %v489, %s494
    %v496 = vpop.permute.xlu0 %495
    %s498 = sor.u32 256, 16
    %499 = vbcast.lane.b32.xlu0 %v489, %s498
    %v500 = vpop.permute.xlu0 %499
    %s502 = sor.u32 256, 24
    %503 = vbcast.lane.b32.xlu0 %v489, %s502
    %v504 = vpop.permute.xlu0 %503
    %v505 = vmul.f32 %v54, %v473
    %v506 = vmul.f32 %v55, %v473
    %v507 = vmul.f32 %v56, %v477
    %v508 = vmul.f32 %v57, %v477
    %v509 = vmul.f32 %v58, %v481
    %v510 = vmul.f32 %v59, %v481
    %v511 = vmul.f32 %v60, %v485
    %v512 = vmul.f32 %v61, %v485
    %v513 = vmul.f32 %v62, %v492
    %v514 = vmul.f32 %v63, %v492
    %v515 = vmul.f32 %v64, %v496
    %v516 = vmul.f32 %v65, %v496
    %v517 = vmul.f32 %v66, %v500
    %v518 = vmul.f32 %v67, %v500
    %v519 = vmul.f32 %v68, %v504
    %v520 = vmul.f32 %v69, %v504
    %521 = vst [vmem:[#allocation8] sm:$0xff] %v505
    %522 = vst [vmem:[#allocation8 + $0x8] sm:$0xff] %v506
    %523 = vst [vmem:[#allocation8 + $0x10] sm:$0xff] %v507
    %524 = vst [vmem:[#allocation8 + $0x18] sm:$0xff] %v508
    %525 = vst [vmem:[#allocation8 + $0x20] sm:$0xff] %v509
    %526 = vst [vmem:[#allocation8 + $0x28] sm:$0xff] %v510
    %527 = vst [vmem:[#allocation8 + $0x30] sm:$0xff] %v511
    %528 = vst [vmem:[#allocation8 + $0x38] sm:$0xff] %v512
    %529 = vst [vmem:[#allocation8 + $0x40] sm:$0xff] %v513
    %530 = vst [vmem:[#allocation8 + $0x48] sm:$0xff] %v514
    %531 = vst [vmem:[#allocation8 + $0x50] sm:$0xff] %v515
    %532 = vst [vmem:[#allocation8 + $0x58] sm:$0xff] %v516
    %533 = vst [vmem:[#allocation8 + $0x60] sm:$0xff] %v517
    %534 = vst [vmem:[#allocation8 + $0x68] sm:$0xff] %v518
    %535 = vst [vmem:[#allocation8 + $0x70] sm:$0xff] %v519
    %536 = vst [vmem:[#allocation8 + $0x78] sm:$0xff] %v520
    // Predicated region
    $region26: #{channel_attention_forward.1} parent=1 // pred_check
      _
    $region27: #{channel_attention_forward.1} parent=1 // pred_check_branch
      %538 = sbr.rel (0) target = $region29
    $region28: #{channel_attention_forward.1} parent=1 // pred_region
      %s540 = ssub.s32 2048, 2048
      %541 = vsyncadd [#allocation4], %s540
      %s542 = sshll.u32 [#allocation8], 4
      %s543 = int_to_ptr.vmem [resolvable:$true] %s542
      %548 = dma.vmem_to_hbm [thread:$0]  %s543, 2048, %s3, [#allocation4], 256, 256, 16
    $region29: #{channel_attention_forward.1} parent=1 // pred_fallthru
      _
    // Predicated region
    $region30: #{channel_attention_forward.1} parent=1 // pred_check
      _
    $region31: #{channel_attention_forward.1} parent=1 // pred_check_branch
      %550 = sbr.rel (0) target = $region33
    $region32: #{channel_attention_forward.1} parent=1 // pred_region
      %551 = dma.done [#allocation4], 2048
    $region33: #{channel_attention_forward.1} parent=1 // pred_fallthru
      _
    %552 = vsyncpa [#allocation3], 1
    %553 = vsyncpa [#allocation6], 1
    %554 = vsyncpa [#allocation4], 1

</llo_original>
